<compile_context>
chip_gen: v7x
topology: tpu7x:2x2x1
jax: 0.10.0
libtpu: 0.0.40
codegen_flags: <defaults>
</compile_context>

<pallas_src>
import functools

import jax
import jax.numpy as jnp
from jax.experimental import pallas as pl
from jax.experimental.pallas import tpu as pltpu


# -----------------------------------------------------------------------------
# Helpers
# -----------------------------------------------------------------------------
def _round_up(x, m):
    return ((x + m - 1) // m) * m


def _choose_batch_tile(B, S, target_rows=256):
    """Pick Bt (batch elements per grid step) so Bt*S ~ target_rows,
    Bt divides B and Bt*S is sublane-aligned (or equals the full extent)."""
    bt = max(1, min(B, max(1, target_rows // max(1, S))))
    while bt > 1 and (B % bt != 0 or (bt * S) % 8 != 0):
        bt -= 1
    if (bt * S) % 8 != 0:
        bt = B  # full-extent block always satisfies the (8,128) rule
    return bt


def _build_score_stacks(fw_w, bw_w, seq_len, width):
    """Build the (n_layers, S, S) forward/backward score matrices for all
    layers at once (matches the PyTorch loops exactly)."""
    L = fw_w.shape[0]
    fwd = jnp.zeros((L, seq_len, seq_len), jnp.float32)
    for cur in range(seq_len):
        start = max(cur - width, 0)
        length = cur + 1 - start
        vals = jax.nn.softmax(fw_w[:, -length:], axis=-1)      # (L, length)
        fwd = fwd.at[:, start:cur + 1, cur].set(vals)

    bwd = jnp.zeros((L, seq_len, seq_len), jnp.float32)
    for cur in range(seq_len):
        end = min(seq_len, cur + width + 1)
        length = end - cur
        vals = jax.nn.softmax(bw_w[:, :length], axis=-1)       # (L, length)
        bwd = bwd.at[:, cur:end, cur].set(vals)
    return fwd, bwd


# -----------------------------------------------------------------------------
# Pallas kernel: whole forward pass
#   grid = (direction, batch_tile, layer)   -- layer is the sequential axis
#   per step:
#     l == 0 : load the input slab into the resident activation scratch
#     cur = kron(I_Bt, score^T) @ act                  (sequence mixing, f32)
#     cur = Highway_{n_highway}(cur)                   (fused 2D-wide proj, bf16 MXU)
#     cur = cur + act   if l != 0                      (outer residual)
#     act <- cur ;  out[l, dir, tile] <- cur
# -----------------------------------------------------------------------------
@functools.lru_cache(maxsize=None)
def _build_forward_kernel(B, S, D, n_layers, n_highway, bt):
    R = bt * S                              # rows (sub-batch * seq) per step
    H = n_highway
    GP = _round_up(D, 128)                  # lane-aligned offset of gate half
    F = GP + D                              # fused projection width
    n_btiles = B // bt

    def kernel(x_ref, scoreT_ref, w_ref, b_ref, out_ref, act_ref):
        l = pl.program_id(2)

        @pl.when(l == 0)
        def _():
            act_ref[...] = x_ref[...]

        x = act_ref[...]                                        # (R, D) f32
        # local sequence mixing (block-diagonal over the bt sub-batches)
        cur = jnp.dot(scoreT_ref[0], x, preferred_element_type=jnp.float32)

        # highway stack: one fused (R,D)@(D,F) projection per sub-layer.
        # bf16 MXU inputs, f32 accumulation; gating math stays f32.
        for h in range(H):
            proj = jnp.dot(cur.astype(jnp.bfloat16), w_ref[0, h],
                           preferred_element_type=jnp.float32)
            proj = proj + b_ref[0, h]                           # (R, F) f32
            pn = proj[:, :D]                                    # nonlinear half
            pg = proj[:, GP:]                                   # gate half (128-aligned)
            gate = jax.nn.sigmoid(pg)
            cur = gate * cur + (1.0 - gate) * jnp.maximum(pn, 0.0)

        # outer residual (cache == this layer's input) for layers > 0
        cur = cur + jnp.where(l == 0, 0.0, 1.0) * x

        act_ref[...] = cur                                      # stays resident
        out_ref[0] = cur.astype(out_ref.dtype)

    return pl.pallas_call(
        kernel,
        out_shape=jax.ShapeDtypeStruct((n_layers * 2, B * S, D), jnp.float32),
        grid_spec=pltpu.PrefetchScalarGridSpec(
            num_scalar_prefetch=0,
            grid=(2, n_btiles, n_layers),
            in_specs=[
                # flattened activations (B*S, D)
                pl.BlockSpec((R, D), lambda d, b, l: (b, 0)),
                # block-diagonal score^T per (direction, layer): (2*L, R, R)
                pl.BlockSpec((1, R, R),
                             lambda d, b, l: (d * n_layers + l, 0, 0)),
                # fused highway weights (bf16): (2*L, H, D, F)
                pl.BlockSpec((1, H, D, F),
                             lambda d, b, l: (d * n_layers + l, 0, 0, 0)),
                # fused highway biases (f32): (2*L, H, 1, F)
                pl.BlockSpec((1, H, 1, F),
                             lambda d, b, l: (d * n_layers + l, 0, 0, 0)),
            ],
            # stacked output (L*2, B*S, D): layer-major, direction-minor
            out_specs=pl.BlockSpec((1, R, D), lambda d, b, l: (l * 2 + d, b, 0)),
            scratch_shapes=[pltpu.VMEM((R, D), jnp.float32)],
        ),
        compiler_params=pltpu.CompilerParams(
            dimension_semantics=("parallel", "parallel", "arbitrary")),
    )


# -----------------------------------------------------------------------------
# Full forward: LBLHighwayBiLmV2.forward (use_position=False, dropout=0.0)
# -----------------------------------------------------------------------------
@functools.partial(jax.jit, static_argnames=("width", "n_layers", "n_highway"))
def lbl_highway_bilm_v2_forward(inputs, masks, params, *, width, n_layers,
                                n_highway):
    del masks  # unused in the reference forward
    B, S, D = inputs.shape
    bt = _choose_batch_tile(B, S)
    R = bt * S
    GP = _round_up(D, 128)

    # --- score matrices (all layers, both directions), transposed + block-diag
    fwd_sc, bwd_sc = _build_score_stacks(
        params["forward_weights"], params["backward_weights"], S, width)
    scoreT = jnp.stack([jnp.swapaxes(fwd_sc, -1, -2),
                        jnp.swapaxes(bwd_sc, -1, -2)], axis=0)      # (2,L,S,S)
    eye_bt = jnp.eye(bt, dtype=jnp.float32)
    scoreT_blk = jnp.einsum("ij,dlts->dlitjs", eye_bt, scoreT)
    scoreT_blk = scoreT_blk.reshape(2 * n_layers, R, R)

    # --- fused highway params, stacked over (direction, layer)
    def prep(hp):
        w, b = hp["w"], hp["b"]                    # (L,H,D,2D) f32 / (L,H,1,2D) f32
        if GP != D:                                # place gate half at lane 128*k
            pad_w = jnp.zeros(w.shape[:-1] + (GP - D,), w.dtype)
            pad_b = jnp.zeros(b.shape[:-1] + (GP - D,), b.dtype)
            w = jnp.concatenate([w[..., :D], pad_w, w[..., D:]], axis=-1)
            b = jnp.concatenate([b[..., :D], pad_b, b[..., D:]], axis=-1)
        return w, b

    fw_w, fw_b = prep(params["forward_highway"])
    bw_w, bw_b = prep(params["backward_highway"])
    F = GP + D
    w_all = jnp.stack([fw_w, bw_w], axis=0).astype(jnp.bfloat16)
    w_all = w_all.reshape(2 * n_layers, n_highway, D, F)
    b_all = jnp.stack([fw_b, bw_b], axis=0).reshape(2 * n_layers, n_highway, 1, F)

    fn = _build_forward_kernel(B, S, D, n_layers, n_highway, bt)
    out = fn(inputs.reshape(B * S, D), scoreT_blk, w_all, b_all)    # (L*2, B*S, D)

    out = out.reshape(n_layers, 2, B, S, D)
    # concat([forward, backward], dim=-1), stacked over layers
    return jnp.concatenate([out[:, 0], out[:, 1]], axis=-1)         # (L, B, S, 2D)


# -----------------------------------------------------------------------------
# Pure-JAX reference (same math, mirrors the bf16 MXU inputs) for a self-check.
# -----------------------------------------------------------------------------
def _reference_forward(inputs, params, *, width, n_layers, n_highway):
    B, S, D = inputs.shape
    fwd_sc, bwd_sc = _build_score_stacks(
        params["forward_weights"], params["backward_weights"], S, width)

    def highway(x, w, b):
        cur = x
        for h in range(n_highway):
            proj = jnp.einsum("bsd,de->bse",
                              cur.astype(jnp.bfloat16),
                              w[h].astype(jnp.bfloat16),
                              preferred_element_type=jnp.float32) + b[h]
            pn, pg = proj[..., :D], proj[..., D:]
            g = jax.nn.sigmoid(pg)
            cur = g * cur + (1.0 - g) * jnp.maximum(pn, 0.0)
        return cur

    fwd_seq, bwd_seq = inputs, inputs
    outs = []
    for l in range(n_layers):
        nf = jnp.einsum("st,bsd->btd", fwd_sc[l], fwd_seq)
        nb = jnp.einsum("st,bsd->btd", bwd_sc[l], bwd_seq)
        nf = highway(nf, params["forward_highway"]["w"][l],
                     params["forward_highway"]["b"][l])
        nb = highway(nb, params["backward_highway"]["w"][l],
                     params["backward_highway"]["b"][l])
        if l != 0:
            nf = nf + fwd_seq
            nb = nb + bwd_seq
        fwd_seq, bwd_seq = nf, nb
        outs.append(jnp.concatenate([fwd_seq, bwd_seq], axis=-1))
    return jnp.stack(outs, axis=0)


# -----------------------------------------------------------------------------
# Deterministic parameter init (shapes follow the PyTorch __init__).
#   forward_weights / backward_weights : (n_layers, width + 1)
#   Highway(hidden, n_highway): per sub-layer Linear(D, 2D), kept FUSED:
#     w : (n_layers, n_highway, D, 2D)  (pre-transposed; cols [:D]=nonlinear,
#                                        cols [D:]=gate)
#     b : (n_layers, n_highway, 1, 2D)  (gate half filled with 1.0, AllenNLP-style)
# -----------------------------------------------------------------------------
def init_params(key, *, width, hidden_size, n_layers, n_highway):
    D = hidden_size

    def make_highway(k):
        # torch Linear(D, 2D) has weight (2D, D); x @ W^T == x @ W.T
        w = jax.random.normal(k, (n_layers, n_highway, 2 * D, D), jnp.float32) * 0.1
        w_fused = jnp.swapaxes(w, -1, -2)                       # (L, H, D, 2D)
        b = jnp.concatenate(
            [jnp.zeros((n_layers, n_highway, 1, D), jnp.float32),
             jnp.ones((n_layers, n_highway, 1, D), jnp.float32)], axis=-1)
        return {"w": w_fused, "b": b}

    k1, k2, k3, k4 = jax.random.split(key, 4)
    return {
        "forward_weights": jax.random.normal(k1, (n_layers, width + 1), jnp.float32),
        "backward_weights": jax.random.normal(k2, (n_layers, width + 1), jnp.float32),
        "forward_highway": make_highway(k3),
        "backward_highway": make_highway(k4),
    }


if __name__ == "__main__":
    # small shapes consistent with the module
    BATCH, SEQ, HIDDEN = 2, 8, 32
    WIDTH, N_LAYERS, N_HIGHWAY = 3, 2, 2

    key = jax.random.PRNGKey(0)
    key, k_in = jax.random.split(key)
    inputs = jax.random.normal(k_in, (BATCH, SEQ, HIDDEN), jnp.float32)
    masks = jnp.ones((BATCH, SEQ), jnp.float32)   # accepted, unused (as in ref)

    params = init_params(key, width=WIDTH, hidden_size=HIDDEN,
                         n_layers=N_LAYERS, n_highway=N_HIGHWAY)

    out = lbl_highway_bilm_v2_forward(
        inputs, masks, params,
        width=WIDTH, n_layers=N_LAYERS, n_highway=N_HIGHWAY)
    out = jax.block_until_ready(out)

    assert out.shape == (N_LAYERS, BATCH, SEQ, 2 * HIDDEN), out.shape

    ref = _reference_forward(inputs, params, width=WIDTH, n_layers=N_LAYERS,
                             n_highway=N_HIGHWAY)
    ref = jax.block_until_ready(ref)
    max_err = float(jnp.max(jnp.abs(out - ref)))
    # tolerance covers bf16 MXU inputs (gating/accumulation stay f32)
    assert jnp.allclose(out, ref, atol=1e-2, rtol=1e-2), f"mismatch: {max_err}"

    print("KERNEL_OK")
</pallas_src>

<mosaic_0001>
module attributes {stable_mosaic.version = 11 : i64} {
  func.func @kernel(%arg0: i32, %arg1: i32, %arg2: i32, %arg3: memref<16x32xf32, #tpu.memory_space<vmem>>, %arg4: memref<1x16x16xf32, #tpu.memory_space<vmem>>, %arg5: memref<1x2x32x160xbf16, #tpu.memory_space<vmem>>, %arg6: memref<1x2x1x160xf32, #tpu.memory_space<vmem>>, %arg7: memref<1x16x32xf32, #tpu.memory_space<vmem>>, %arg8: memref<16x32xf32, #tpu.memory_space<vmem>>) attributes {dimension_semantics = [#tpu.dimension_semantics<parallel>, #tpu.dimension_semantics<parallel>, #tpu.dimension_semantics<arbitrary>], iteration_bounds = array<i64: 2, 1, 2>, scalar_prefetch = 0 : i64, scratch_operands = 1 : i64, tpu.core_type = #tpu.core_type<tc>, window_params = [{transform_indices = @transform_0, window_bounds = array<i64: 16, 32>}, {transform_indices = @transform_1, window_bounds = array<i64: 1, 16, 16>}, {transform_indices = @transform_2, window_bounds = array<i64: 1, 2, 32, 160>}, {transform_indices = @transform_3, window_bounds = array<i64: 1, 2, 1, 160>}, {transform_indices = @transform_4, window_bounds = array<i64: 1, 16, 32>}]} {
    %c0_i32 = arith.constant 0 : i32
    %0 = arith.cmpi eq, %arg2, %c0_i32 : i32
    %1 = arith.extui %0 : i1 to i32
    %c0_i32_0 = arith.constant 0 : i32
    %2 = arith.cmpi ne, %1, %c0_i32_0 : i32
    scf.if %2 {
      %c0_36 = arith.constant 0 : index
      %c0_37 = arith.constant 0 : index
      %60 = vector.load %arg3[%c0_36, %c0_37] : memref<16x32xf32, #tpu.memory_space<vmem>>, vector<16x32xf32>
      %c0_38 = arith.constant 0 : index
      %c0_39 = arith.constant 0 : index
      %61 = vector.load %arg8[%c0_38, %c0_39] : memref<16x32xf32, #tpu.memory_space<vmem>>, vector<16x32xf32>
      tpu.vector_store %arg8[%c0_38, %c0_39], %60 {strides = array<i32>} : memref<16x32xf32, #tpu.memory_space<vmem>>, vector<16x32xf32>,
    } else {
    }
    %c0 = arith.constant 0 : index
    %c0_1 = arith.constant 0 : index
    %3 = vector.load %arg8[%c0, %c0_1] : memref<16x32xf32, #tpu.memory_space<vmem>>, vector<16x32xf32>
    %c0_2 = arith.constant 0 : index
    %c0_3 = arith.constant 0 : index
    %c0_4 = arith.constant 0 : index
    %4 = vector.load %arg4[%c0_2, %c0_3, %c0_4] : memref<1x16x16xf32, #tpu.memory_space<vmem>>, vector<1x16x16xf32>
    %5 = vector.shape_cast %4 : vector<1x16x16xf32> to vector<16x16xf32>
    %cst = arith.constant dense<0.000000e+00> : vector<16x32xf32>
    %6 = tpu.matmul %5, %3, %cst {dimension_numbers = #tpu.dot_dimension_numbers<[1], [0], [0], [1], [0, 0, 1, 1], [], []>} : vector<16x16xf32>, vector<16x32xf32>, vector<16x32xf32> -> vector<16x32xf32>
    %7 = arith.truncf %6 : vector<16x32xf32> to vector<16x32xbf16>
    %c0_5 = arith.constant 0 : index
    %c0_6 = arith.constant 0 : index
    %c0_7 = arith.constant 0 : index
    %c0_8 = arith.constant 0 : index
    %8 = vector.load %arg5[%c0_5, %c0_6, %c0_7, %c0_8] : memref<1x2x32x160xbf16, #tpu.memory_space<vmem>>, vector<1x1x32x160xbf16>
    %9 = vector.shape_cast %8 : vector<1x1x32x160xbf16> to vector<32x160xbf16>
    %cst_9 = arith.constant dense<0.000000e+00> : vector<16x160xf32>
    %10 = tpu.matmul %7, %9, %cst_9 {dimension_numbers = #tpu.dot_dimension_numbers<[1], [0], [0], [1], [0, 0, 1, 1], [], []>} : vector<16x32xbf16>, vector<32x160xbf16>, vector<16x160xf32> -> vector<16x160xf32>
    %c0_10 = arith.constant 0 : index
    %c0_11 = arith.constant 0 : index
    %c0_12 = arith.constant 0 : index
    %c0_13 = arith.constant 0 : index
    %11 = vector.load %arg6[%c0_10, %c0_11, %c0_12, %c0_13] : memref<1x2x1x160xf32, #tpu.memory_space<vmem>>, vector<1x1x1x160xf32>
    %12 = vector.shape_cast %11 : vector<1x1x1x160xf32> to vector<1x160xf32>
    %13 = vector.broadcast %12 : vector<1x160xf32> to vector<16x160xf32>
    %14 = arith.addf %10, %13 : vector<16x160xf32>
    %15 = vector.extract_strided_slice %14 {offsets = [0, 0], sizes = [16, 32], strides = [1, 1]} : vector<16x160xf32> to vector<16x32xf32>
    %16 = vector.extract_strided_slice %14 {offsets = [0, 128], sizes = [16, 32], strides = [1, 1]} : vector<16x160xf32> to vector<16x32xf32>
    %17 = arith.negf %16 : vector<16x32xf32>
    %18 = math.exp %17 : vector<16x32xf32>
    %cst_14 = arith.constant 1.000000e+00 : f32
    %19 = vector.broadcast %cst_14 : f32 to vector<16x32xf32>
    %20 = arith.addf %19, %18 : vector<16x32xf32>
    %21 = arith.divf %19, %20 : vector<16x32xf32>
    %22 = arith.mulf %21, %6 : vector<16x32xf32>
    %cst_15 = arith.constant 1.000000e+00 : f32
    %23 = vector.broadcast %cst_15 : f32 to vector<16x32xf32>
    %24 = arith.subf %23, %21 : vector<16x32xf32>
    %cst_16 = arith.constant 0.000000e+00 : f32
    %25 = vector.broadcast %cst_16 : f32 to vector<16x32xf32>
    %26 = arith.maximumf %15, %25 : vector<16x32xf32>
    %27 = arith.mulf %24, %26 : vector<16x32xf32>
    %28 = arith.addf %22, %27 : vector<16x32xf32>
    %29 = arith.truncf %28 : vector<16x32xf32> to vector<16x32xbf16>
    %c0_17 = arith.constant 0 : index
    %c1 = arith.constant 1 : index
    %c0_18 = arith.constant 0 : index
    %c0_19 = arith.constant 0 : index
    %30 = vector.load %arg5[%c0_17, %c1, %c0_18, %c0_19] : memref<1x2x32x160xbf16, #tpu.memory_space<vmem>>, vector<1x1x32x160xbf16>
    %31 = vector.shape_cast %30 : vector<1x1x32x160xbf16> to vector<32x160xbf16>
    %cst_20 = arith.constant dense<0.000000e+00> : vector<16x160xf32>
    %32 = tpu.matmul %29, %31, %cst_20 {dimension_numbers = #tpu.dot_dimension_numbers<[1], [0], [0], [1], [0, 0, 1, 1], [], []>} : vector<16x32xbf16>, vector<32x160xbf16>, vector<16x160xf32> -> vector<16x160xf32>
    %c0_21 = arith.constant 0 : index
    %c1_22 = arith.constant 1 : index
    %c0_23 = arith.constant 0 : index
    %c0_24 = arith.constant 0 : index
    %33 = vector.load %arg6[%c0_21, %c1_22, %c0_23, %c0_24] : memref<1x2x1x160xf32, #tpu.memory_space<vmem>>, vector<1x1x1x160xf32>
    %34 = vector.shape_cast %33 : vector<1x1x1x160xf32> to vector<1x160xf32>
    %35 = vector.broadcast %34 : vector<1x160xf32> to vector<16x160xf32>
    %36 = arith.addf %32, %35 : vector<16x160xf32>
    %37 = vector.extract_strided_slice %36 {offsets = [0, 0], sizes = [16, 32], strides = [1, 1]} : vector<16x160xf32> to vector<16x32xf32>
    %38 = vector.extract_strided_slice %36 {offsets = [0, 128], sizes = [16, 32], strides = [1, 1]} : vector<16x160xf32> to vector<16x32xf32>
    %39 = arith.negf %38 : vector<16x32xf32>
    %40 = math.exp %39 : vector<16x32xf32>
    %cst_25 = arith.constant 1.000000e+00 : f32
    %41 = vector.broadcast %cst_25 : f32 to vector<16x32xf32>
    %42 = arith.addf %41, %40 : vector<16x32xf32>
    %43 = arith.divf %41, %42 : vector<16x32xf32>
    %44 = arith.mulf %43, %28 : vector<16x32xf32>
    %cst_26 = arith.constant 1.000000e+00 : f32
    %45 = vector.broadcast %cst_26 : f32 to vector<16x32xf32>
    %46 = arith.subf %45, %43 : vector<16x32xf32>
    %cst_27 = arith.constant 0.000000e+00 : f32
    %47 = vector.broadcast %cst_27 : f32 to vector<16x32xf32>
    %48 = arith.maximumf %37, %47 : vector<16x32xf32>
    %49 = arith.mulf %46, %48 : vector<16x32xf32>
    %50 = arith.addf %44, %49 : vector<16x32xf32>
    %c0_i32_28 = arith.constant 0 : i32
    %51 = arith.cmpi eq, %arg2, %c0_i32_28 : i32
    %cst_29 = arith.constant 0.000000e+00 : f32
    %cst_30 = arith.constant 1.000000e+00 : f32
    %52 = arith.select %51, %cst_29, %cst_30 : f32
    %53 = vector.broadcast %52 : f32 to vector<16x32xf32>
    %54 = arith.mulf %53, %3 : vector<16x32xf32>
    %55 = arith.addf %50, %54 : vector<16x32xf32>
    %c0_31 = arith.constant 0 : index
    %c0_32 = arith.constant 0 : index
    %56 = vector.load %arg8[%c0_31, %c0_32] : memref<16x32xf32, #tpu.memory_space<vmem>>, vector<16x32xf32>
    tpu.vector_store %arg8[%c0_31, %c0_32], %55 {strides = array<i32>} : memref<16x32xf32, #tpu.memory_space<vmem>>, vector<16x32xf32>,
    %c0_33 = arith.constant 0 : index
    %c0_34 = arith.constant 0 : index
    %c0_35 = arith.constant 0 : index
    %57 = vector.load %arg7[%c0_33, %c0_34, %c0_35] : memref<1x16x32xf32, #tpu.memory_space<vmem>>, vector<1x16x32xf32>
    %58 = vector.shape_cast %57 : vector<1x16x32xf32> to vector<16x32xf32>
    %59 = vector.shape_cast %55 : vector<16x32xf32> to vector<1x16x32xf32>
    tpu.vector_store %arg7[%c0_33, %c0_34, %c0_35], %59 {strides = array<i32>} : memref<1x16x32xf32, #tpu.memory_space<vmem>>, vector<1x16x32xf32>,
    return
  }
  func.func @transform_0(%arg0: i32, %arg1: i32, %arg2: i32) -> (i32, i32) {
    %c0_i32 = arith.constant 0 : i32
    %c0_i32_0 = arith.constant 0 : i32
    return %arg1, %c0_i32 : i32, i32
  }
  func.func @transform_1(%arg0: i32, %arg1: i32, %arg2: i32) -> (i32, i32, i32) {
    %c2_i32 = arith.constant 2 : i32
    %0 = arith.muli %arg0, %c2_i32 : i32
    %1 = arith.addi %0, %arg2 : i32
    %c0_i32 = arith.constant 0 : i32
    %c0_i32_0 = arith.constant 0 : i32
    %c0_i32_1 = arith.constant 0 : i32
    return %1, %c0_i32, %c0_i32_0 : i32, i32, i32
  }
  func.func @transform_2(%arg0: i32, %arg1: i32, %arg2: i32) -> (i32, i32, i32, i32) {
    %c2_i32 = arith.constant 2 : i32
    %0 = arith.muli %arg0, %c2_i32 : i32
    %1 = arith.addi %0, %arg2 : i32
    %c0_i32 = arith.constant 0 : i32
    %c0_i32_0 = arith.constant 0 : i32
    %c0_i32_1 = arith.constant 0 : i32
    %c0_i32_2 = arith.constant 0 : i32
    return %1, %c0_i32, %c0_i32_0, %c0_i32_1 : i32, i32, i32, i32
  }
  func.func @transform_3(%arg0: i32, %arg1: i32, %arg2: i32) -> (i32, i32, i32, i32) {
    %c2_i32 = arith.constant 2 : i32
    %0 = arith.muli %arg0, %c2_i32 : i32
    %1 = arith.addi %0, %arg2 : i32
    %c0_i32 = arith.constant 0 : i32
    %c0_i32_0 = arith.constant 0 : i32
    %c0_i32_1 = arith.constant 0 : i32
    %c0_i32_2 = arith.constant 0 : i32
    return %1, %c0_i32, %c0_i32_0, %c0_i32_1 : i32, i32, i32, i32
  }
  func.func @transform_4(%arg0: i32, %arg1: i32, %arg2: i32) -> (i32, i32, i32) {
    %c2_i32 = arith.constant 2 : i32
    %0 = arith.muli %arg2, %c2_i32 : i32
    %1 = arith.addi %0, %arg0 : i32
    %c0_i32 = arith.constant 0 : i32
    %c0_i32_0 = arith.constant 0 : i32
    return %1, %arg1, %c0_i32 : i32, i32, i32
  }
}

</mosaic_0001>

<llo_original>
// kernel: lbl_highway_bilm_v2_forward.1
$region0: #{lbl_highway_bilm_v2_forward.1}
  #allocation0 [shape = 'u32[]', space=smem, size = 0x4, offset = 0x4, fixed_abs, tag = 'smem constant byte address 0x4 - core index']
  #allocation1 [shape = 'u32[144,128]{1,0:T(1,128)}', space=vmem, size = 0x12000, scoped, tag = 'internal scratch']
  #allocation2 [shape = 'f32[16,32]{1,0:T(8,128)}', space=vmem, size = 0x2000, scoped, tag = 'scratch operand']
  %s0 = inlined_call_operand.vmem [shape: f32[16,32], index: 0, kind: input, shape index: {}]
  %s1 = inlined_call_operand.vmem [shape: f32[4,16,16], index: 1, kind: input, shape index: {}]
  %s2 = inlined_call_operand.vmem [shape: bf16[4,2,32,160], index: 2, kind: input, shape index: {}]
  %s3 = inlined_call_operand.vmem [shape: f32[4,2,1,160], index: 3, kind: input, shape index: {}]
  %s4 = inlined_call_operand.vmem [shape: f32[4,16,32], index: 4, kind: output, shape index: {}]
  %s5 = sld [smem:[#allocation0]]
  $region53: #{lbl_highway_bilm_v2_forward.1} parent=0
    _
  %s7 = ssub.s32 1, %s5
  %s8 = scalar_select 0, %s7, %s5
  loop: start=0, step=1, limit=6
  $region2: #{lbl_highway_bilm_v2_forward.1} parent=0 // loop_pre_header
    _
  $region3: #{lbl_highway_bilm_v2_forward.1} parent=0 // loop_header
    %s10 = sphi 0, %s14
    %p11 = scmp.ge.s32.totalorder %s10, 6
    %s17 = sphi 0, %s36
    %s18 = sphi 0, %s32
    %s19 = sphi 0, %s28
    %s20 = sphi 0, %s17
    %s21 = sphi 0, %s18
    %s22 = sphi 0, %s19
    %s23 = sphi 0, %s20
    %s24 = sphi 0, %s21
    %s25 = sphi 0, %s22
    %s39 = sphi 0, %s41
    %s42 = sphi 0, %s39
    %s43 = sphi 0, %s42
    %s59 = sphi 0, %s43
    %s69 = sphi 0, %s71
    %s72 = sphi 0, %s69
    %s73 = sphi 0, %s72
    %s89 = sphi 0, %s73
    %s99 = sphi 0, %s101
    %s102 = sphi 0, %s99
    %s103 = sphi 0, %s102
    %s119 = sphi 0, %s103
    %s129 = sphi 0, %s131
    %s132 = sphi 0, %s129
    %s133 = sphi 0, %s132
    %s149 = sphi 0, %s133
    %s161 = sphi 0, %s163
    %s164 = sphi 0, %s161
    %s165 = sphi 0, %s164
    %s181 = sphi 0, %s165
  $region4: #{lbl_highway_bilm_v2_forward.1} parent=0 // loop_header_branch
    %13 = sbr.rel (%p11) target = $region8
  $region5: #{lbl_highway_bilm_v2_forward.1} parent=0 // loop_body
    %s15 = ssub.s32 %s10, 1
    %s16 = ssub.s32 %s10, 2
    %s26 = sadd.s32 1, %s19
    %p27 = scmp.ge.s32.totalorder %s26, 2
    %s28 = scalar_select %p27, 0, %s26
    %s29 = sadd.s32 1, %s18
    %s30 = scalar_select %p27, %s29, %s18
    %p31 = scmp.ge.s32.totalorder %s30, 1
    %s32 = scalar_select %p31, 0, %s30
    %s33 = sadd.s32 1, %s17
    %s34 = scalar_select %p31, %s33, %s17
    %p35 = scmp.ge.s32.totalorder %s34, 2
    %s36 = scalar_select %p35, 0, %s34
    %s37 = ssub.s32 %s18, %s32
    %p38 = scmp.eq.s32.totalorder %s37, 0
    %s40 = sadd.s32 %s39, 1
    %s41 = scalar_select %p38, %s39, %s40
    %p44 = pneg %p38
    %p45 = scmp.eq.s32.totalorder %s10, 3
    %p46 = por %p44, %p45
    %p47 = scmp.ne.s32.totalorder %s39, %s42
    %p48 = scmp.eq.s32.totalorder %s10, 0
    %p49 = por %p47, %p48
    %p50 = scmp.ne.s32.totalorder %s39, %s42
    %p51 = scmp.eq.s32.totalorder %s15, 3
    %p52 = por %p50, %p51
    %p53 = scmp.ne.s32.totalorder %s42, %s43
    %p54 = scmp.eq.s32.totalorder %s15, 0
    %p55 = por %p53, %p54
    %p56 = scmp.ne.s32.totalorder %s42, %s43
    %p57 = scmp.eq.s32.totalorder %s16, 3
    %p58 = por %p56, %p57
    %p60 = scmp.ne.s32.totalorder %s43, %s59
    %p61 = scmp.eq.s32.totalorder %s16, 0
    %p62 = por %p60, %p61
    %s63 = smul.u32 %s17, 2
    %s64 = sadd.s32 %s63, %s19
    %s65 = smul.u32 %s36, 2
    %s66 = sadd.s32 %s65, %s28
    %s67 = ssub.s32 %s64, %s66
    %p68 = scmp.eq.s32.totalorder %s67, 0
    %s70 = sadd.s32 %s69, 1
    %s71 = scalar_select %p68, %s69, %s70
    %p74 = pneg %p68
    %p75 = scmp.eq.s32.totalorder %s10, 3
    %p76 = por %p74, %p75
    %p77 = scmp.ne.s32.totalorder %s69, %s72
    %p78 = scmp.eq.s32.totalorder %s10, 0
    %p79 = por %p77, %p78
    %p80 = scmp.ne.s32.totalorder %s69, %s72
    %p81 = scmp.eq.s32.totalorder %s15, 3
    %p82 = por %p80, %p81
    %p83 = scmp.ne.s32.totalorder %s72, %s73
    %p84 = scmp.eq.s32.totalorder %s15, 0
    %p85 = por %p83, %p84
    %p86 = scmp.ne.s32.totalorder %s72, %s73
    %p87 = scmp.eq.s32.totalorder %s16, 3
    %p88 = por %p86, %p87
    %p90 = scmp.ne.s32.totalorder %s73, %s89
    %p91 = scmp.eq.s32.totalorder %s16, 0
    %p92 = por %p90, %p91
    %s93 = smul.u32 %s17, 2
    %s94 = sadd.s32 %s93, %s19
    %s95 = smul.u32 %s36, 2
    %s96 = sadd.s32 %s95, %s28
    %s97 = ssub.s32 %s94, %s96
    %p98 = scmp.eq.s32.totalorder %s97, 0
    %s100 = sadd.s32 %s99, 1
    %s101 = scalar_select %p98, %s99, %s100
    %p104 = pneg %p98
    %p105 = scmp.eq.s32.totalorder %s10, 3
    %p106 = por %p104, %p105
    %p107 = scmp.ne.s32.totalorder %s99, %s102
    %p108 = scmp.eq.s32.totalorder %s10, 0
    %p109 = por %p107, %p108
    %p110 = scmp.ne.s32.totalorder %s99, %s102
    %p111 = scmp.eq.s32.totalorder %s15, 3
    %p112 = por %p110, %p111
    %p113 = scmp.ne.s32.totalorder %s102, %s103
    %p114 = scmp.eq.s32.totalorder %s15, 0
    %p115 = por %p113, %p114
    %p116 = scmp.ne.s32.totalorder %s102, %s103
    %p117 = scmp.eq.s32.totalorder %s16, 3
    %p118 = por %p116, %p117
    %p120 = scmp.ne.s32.totalorder %s103, %s119
    %p121 = scmp.eq.s32.totalorder %s16, 0
    %p122 = por %p120, %p121
    %s123 = smul.u32 %s17, 2
    %s124 = sadd.s32 %s123, %s19
    %s125 = smul.u32 %s36, 2
    %s126 = sadd.s32 %s125, %s28
    %s127 = ssub.s32 %s124, %s126
    %p128 = scmp.eq.s32.totalorder %s127, 0
    %s130 = sadd.s32 %s129, 1
    %s131 = scalar_select %p128, %s129, %s130
    %p134 = pneg %p128
    %p135 = scmp.eq.s32.totalorder %s10, 3
    %p136 = por %p134, %p135
    %p137 = scmp.ne.s32.totalorder %s129, %s132
    %p138 = scmp.eq.s32.totalorder %s10, 0
    %p139 = por %p137, %p138
    %p140 = scmp.ne.s32.totalorder %s129, %s132
    %p141 = scmp.eq.s32.totalorder %s15, 3
    %p142 = por %p140, %p141
    %p143 = scmp.ne.s32.totalorder %s132, %s133
    %p144 = scmp.eq.s32.totalorder %s15, 0
    %p145 = por %p143, %p144
    %p146 = scmp.ne.s32.totalorder %s132, %s133
    %p147 = scmp.eq.s32.totalorder %s16, 3
    %p148 = por %p146, %p147
    %p150 = scmp.ne.s32.totalorder %s133, %s149
    %p151 = scmp.eq.s32.totalorder %s16, 0
    %p152 = por %p150, %p151
    %s153 = smul.u32 %s19, 2
    %s154 = sadd.s32 %s153, %s17
    %s155 = smul.u32 %s28, 2
    %s156 = sadd.s32 %s155, %s36
    %s157 = ssub.s32 %s154, %s156
    %s158 = ssub.s32 %s18, %s32
    %s159 = sor.u32 %s157, %s158
    %p160 = scmp.eq.s32.totalorder %s159, 0
    %s162 = sadd.s32 %s161, 1
    %s163 = scalar_select %p160, %s161, %s162
    %p166 = pneg %p160
    %p167 = scmp.eq.s32.totalorder %s10, 3
    %p168 = por %p166, %p167
    %p169 = scmp.ne.s32.totalorder %s161, %s164
    %p170 = scmp.eq.s32.totalorder %s10, 0
    %p171 = por %p169, %p170
    %p172 = scmp.ne.s32.totalorder %s161, %s164
    %p173 = scmp.eq.s32.totalorder %s15, 3
    %p174 = por %p172, %p173
    %p175 = scmp.ne.s32.totalorder %s164, %s165
    %p176 = scmp.eq.s32.totalorder %s15, 0
    %p177 = por %p175, %p176
    %p178 = scmp.ne.s32.totalorder %s164, %s165
    %p179 = scmp.eq.s32.totalorder %s16, 3
    %p180 = por %p178, %p179
    %p182 = scmp.ne.s32.totalorder %s165, %s181
    %p183 = scmp.eq.s32.totalorder %s16, 0
    %p184 = por %p182, %p183
    %p185 = scmp.le.s32.totalorder 1, %s10
    %p186 = scmp.lt.s32.totalorder %s10, 5
    %p187 = pnand %p185, %p186
    %p188 = pneg %p187
    // Predicated region
    $region9: #{lbl_highway_bilm_v2_forward.1} parent=5 // pred_check
      _
    $region10: #{lbl_highway_bilm_v2_forward.1} parent=5 // pred_check_branch
      %190 = sbr.rel (%p187) target = $region12
    $region11: #{lbl_highway_bilm_v2_forward.1} parent=5 // pred_region
      %s191 = ssub.s32 %s10, 1
      // Predicated region
      $region13: #{lbl_highway_bilm_v2_forward.1} parent=11 // pred_check
        %p192 = pneg %p55
      $region14: #{lbl_highway_bilm_v2_forward.1} parent=11 // pred_check_branch
        %194 = sbr.rel (%p192) target = $region16
      $region15: #{lbl_highway_bilm_v2_forward.1} parent=11 // pred_region
        %s195 = smul.u32 2, %s21
        %p196 = scmp.lt.s32.totalorder %s195, 1
        %s197 = scalar_select %p196, %s195, 1
        %s198 = smul.addr %s197, 8
        %s199 = scalar_lea.vmem %s0, %s198
        %s200 = smul.u32 2, %s21
      $region16: #{lbl_highway_bilm_v2_forward.1} parent=11 // pred_fallthru
        _
    $region12: #{lbl_highway_bilm_v2_forward.1} parent=5 // pred_fallthru
      _
    %p201 = scmp.lt.s32.totalorder %s10, 4
    // Predicated region
    $region17: #{lbl_highway_bilm_v2_forward.1} parent=5 // pred_check
      %p202 = pneg %p201
    $region18: #{lbl_highway_bilm_v2_forward.1} parent=5 // pred_check_branch
      %204 = sbr.rel (%p202) target = $region20
    $region19: #{lbl_highway_bilm_v2_forward.1} parent=5 // pred_region
      // Predicated region
      $region21: #{lbl_highway_bilm_v2_forward.1} parent=19 // pred_check
        %p205 = pneg %p79
      $region22: #{lbl_highway_bilm_v2_forward.1} parent=19 // pred_check_branch
        %207 = sbr.rel (%p205) target = $region24
      $region23: #{lbl_highway_bilm_v2_forward.1} parent=19 // pred_region
        %s208 = smul.u32 %s17, 2
        %s209 = sadd.s32 %s208, %s19
        %p210 = scmp.lt.s32.totalorder %s209, 3
        %s211 = scalar_select %p210, %s209, 3
        %s212 = smul.addr %s211, 2
        %s213 = smul.addr %s212, 8
        %s214 = scalar_lea.vmem %s1, %s213
        %s215 = smul.u32 %s17, 2
        %s216 = sadd.s32 %s215, %s19
      $region24: #{lbl_highway_bilm_v2_forward.1} parent=19 // pred_fallthru
        _
      // Predicated region
      $region25: #{lbl_highway_bilm_v2_forward.1} parent=19 // pred_check
        %p217 = pneg %p109
      $region26: #{lbl_highway_bilm_v2_forward.1} parent=19 // pred_check_branch
        %219 = sbr.rel (%p217) target = $region28
      $region27: #{lbl_highway_bilm_v2_forward.1} parent=19 // pred_region
        %s220 = smul.u32 %s17, 2
        %s221 = sadd.s32 %s220, %s19
        %p222 = scmp.lt.s32.totalorder %s221, 3
        %s223 = scalar_select %p222, %s221, 3
        %s224 = smul.addr %s223, 16
        %s225 = smul.addr %s224, 4
        %s226 = scalar_lea.vmem %s2, %s225
        %s227 = smul.u32 %s17, 2
        %s228 = sadd.s32 %s227, %s19
      $region28: #{lbl_highway_bilm_v2_forward.1} parent=19 // pred_fallthru
        _
      // Predicated region
      $region29: #{lbl_highway_bilm_v2_forward.1} parent=19 // pred_check
        %p229 = pneg %p139
      $region30: #{lbl_highway_bilm_v2_forward.1} parent=19 // pred_check_branch
        %231 = sbr.rel (%p229) target = $region32
      $region31: #{lbl_highway_bilm_v2_forward.1} parent=19 // pred_region
        %s232 = smul.u32 %s17, 2
        %s233 = sadd.s32 %s232, %s19
        %p234 = scmp.lt.s32.totalorder %s233, 3
        %s235 = scalar_select %p234, %s233, 3
        %s236 = smul.addr %s235, 4
        %s237 = scalar_lea.vmem %s3, %s236
        %s238 = smul.u32 %s17, 2
        %s239 = sadd.s32 %s238, %s19
      $region32: #{lbl_highway_bilm_v2_forward.1} parent=19 // pred_fallthru
        _
    $region20: #{lbl_highway_bilm_v2_forward.1} parent=5 // pred_fallthru
      _
    %p240 = scmp.le.s32.totalorder 1, %s10
    %p241 = scmp.lt.s32.totalorder %s10, 5
    %p242 = pnand %p240, %p241
    %p243 = pneg %p242
    // Predicated region
    $region33: #{lbl_highway_bilm_v2_forward.1} parent=5 // pred_check
      _
    $region34: #{lbl_highway_bilm_v2_forward.1} parent=5 // pred_check_branch
      %245 = sbr.rel (%p242) target = $region36
    $region35: #{lbl_highway_bilm_v2_forward.1} parent=5 // pred_region
      %s246 = ssub.s32 %s10, 1
      %s247 = smul.u32 2, %s21
      %p248 = scmp.lt.s32.totalorder %s247, 1
      %s249 = scalar_select %p248, %s247, 1
      %s250 = smul.addr %s249, 8
      %s251 = scalar_lea.vmem %s0, %s250
      %p252 = pneg %p55
      %p253 = pneg %p52
      %s254 = smul.u32 %s20, 2
      %s255 = sadd.s32 %s254, %s22
      %p256 = scmp.lt.s32.totalorder %s255, 3
      %s257 = scalar_select %p256, %s255, 3
      %s258 = smul.addr %s257, 2
      %s259 = smul.addr %s258, 8
      %s260 = scalar_lea.vmem %s1, %s259
      %p261 = pneg %p85
      %p262 = pneg %p82
      %s263 = smul.u32 %s20, 2
      %s264 = sadd.s32 %s263, %s22
      %p265 = scmp.lt.s32.totalorder %s264, 3
      %s266 = scalar_select %p265, %s264, 3
      %s267 = smul.addr %s266, 16
      %s268 = smul.addr %s267, 4
      %s269 = scalar_lea.vmem %s2, %s268
      %p270 = pneg %p115
      %p271 = pneg %p112
      %s272 = smul.u32 %s20, 2
      %s273 = sadd.s32 %s272, %s22
      %p274 = scmp.lt.s32.totalorder %s273, 3
      %s275 = scalar_select %p274, %s273, 3
      %s276 = smul.addr %s275, 4
      %s277 = scalar_lea.vmem %s3, %s276
      %p278 = pneg %p145
      %p279 = pneg %p142
      %p280 = pneg %p177
      %p281 = pneg %p174
      %s282 = smul.u32 %s22, 2
      %s283 = sadd.s32 %s282, %s20
      %s284 = smul.u32 2, %s21
      %p285 = scmp.lt.s32.totalorder %s283, 3
      %s286 = scalar_select %p285, %s283, 3
      %p287 = scmp.lt.s32.totalorder %s284, 1
      %s288 = scalar_select %p287, %s284, 1
      %s289 = smul.addr %s286, 2
      %s290 = sadd.s32 %s288, %s289
      %s291 = smul.addr %s290, 8
      %s292 = scalar_lea.vmem %s4, %s291
      %s293 = smul.u32 2, %s21
      %p294 = scmp.lt.s32.totalorder %s293, 1
      %s295 = scalar_select %p294, %s293, 1
      %s296 = smul.addr %s295, 8
      %s297 = scalar_lea.vmem %s0, %s296
      %s298 = smul.u32 2, %s21
      %s299 = smul.u32 %s20, 2
      %s300 = sadd.s32 %s299, %s22
      %p301 = scmp.lt.s32.totalorder %s300, 3
      %s302 = scalar_select %p301, %s300, 3
      %s303 = smul.addr %s302, 2
      %s304 = smul.addr %s303, 8
      %s305 = scalar_lea.vmem %s1, %s304
      %s306 = smul.u32 %s20, 2
      %s307 = sadd.s32 %s306, %s22
      %s308 = smul.u32 %s20, 2
      %s309 = sadd.s32 %s308, %s22
      %p310 = scmp.lt.s32.totalorder %s309, 3
      %s311 = scalar_select %p310, %s309, 3
      %s312 = smul.addr %s311, 16
      %s313 = smul.addr %s312, 4
      %s314 = scalar_lea.vmem %s2, %s313
      %s315 = smul.u32 %s20, 2
      %s316 = sadd.s32 %s315, %s22
      %s317 = smul.u32 %s20, 2
      %s318 = sadd.s32 %s317, %s22
      %p319 = scmp.lt.s32.totalorder %s318, 3
      %s320 = scalar_select %p319, %s318, 3
      %s321 = smul.addr %s320, 4
      %s322 = scalar_lea.vmem %s3, %s321
      %s323 = smul.u32 %s20, 2
      %s324 = sadd.s32 %s323, %s22
      %s325 = smul.u32 %s22, 2
      %s326 = sadd.s32 %s325, %s20
      %s327 = smul.u32 2, %s21
      %p328 = scmp.lt.s32.totalorder %s326, 3
      %s329 = scalar_select %p328, %s326, 3
      %p330 = scmp.lt.s32.totalorder %s327, 1
      %s331 = scalar_select %p330, %s327, 1
      %s332 = smul.addr %s329, 2
      %s333 = sadd.s32 %s331, %s332
      %s334 = smul.addr %s333, 8
      %s335 = scalar_lea.vmem %s4, %s334
      %s336 = smul.u32 %s22, 2
      %s337 = sadd.s32 %s336, %s20
      %s338 = smul.u32 2, %s21
      %p340 = scmp.eq.s32.totalorder %s22, 0
      // Predicated region
      $region37: #{lbl_highway_bilm_v2_forward.1} parent=35 // pred_check
        %p341 = pneg %p340
      $region38: #{lbl_highway_bilm_v2_forward.1} parent=35 // pred_check_branch
        %343 = sbr.rel (%p341) target = $region40
      $region39: #{lbl_highway_bilm_v2_forward.1} parent=35 // pred_region
        %v344 = vld [vmem:[%s297] sm:$0xff]
        %v345 = vld [vmem:[%s297 + $0x8] sm:$0xff]
        %vm346 = vcmask 261120
        %347 = vst.msk [vmem:[#allocation2] sm:$0xff] %vm346, %v344
        %348 = vst.msk [vmem:[#allocation2 + $0x8] sm:$0xff] %vm346, %v345
      $region40: #{lbl_highway_bilm_v2_forward.1} parent=35 // pred_fallthru
        _
      %v349 = vld [vmem:[#allocation2] sm:$0xff]
      %v350 = vld [vmem:[#allocation2 + $0x8] sm:$0xff]
      %v351 = vld [vmem:[%s305] sm:$0xff]
      %v352 = vld [vmem:[%s305 + $0x8] sm:$0xff]
      %vm353 = vcmask 130048
      %v355 = vsel %vm353, %v351, 0
      %v358 = vsel %vm353, %v352, 0
      %360 = vmatprep.subr.mxu0 0.0
      %361 = vmatpush1.msra.mxu0 %v349
      %362 = vmatprep.subr.mxu0 0.0
      %363 = vmatpush1.msra.mxu0 %v350
      %364 = vmatprep.subr.mxu0 0.0
      %365 = vmatpush1.msra.mxu0 0.0
      %366 = vmatprep.subr.mxu0 0.0
      %367 = vmatpush1.msra.mxu0 0.0
      %368 = vmatprep.subr.mxu0 0.0
      %369 = vmatpush1.msra.mxu0 0.0
      %370 = vmatprep.subr.mxu0 0.0
      %371 = vmatpush1.msra.mxu0 0.0
      %372 = vmatprep.subr.mxu0 0.0
      %373 = vmatpush1.msra.mxu0 0.0
      %374 = vmatprep.subr.mxu0 0.0
      %375 = vmatpush1.msra.mxu0 0.0
      %376 = vmatprep.subr.mxu0 0.0
      %377 = vmatpush1.msra.mxu0 0.0
      %378 = vmatprep.subr.mxu0 0.0
      %379 = vmatpush1.msra.mxu0 0.0
      %380 = vmatprep.subr.mxu0 0.0
      %381 = vmatpush1.msra.mxu0 0.0
      %382 = vmatprep.subr.mxu0 0.0
      %383 = vmatpush1.msra.mxu0 0.0
      %384 = vmatprep.subr.mxu0 0.0
      %385 = vmatpush1.msra.mxu0 0.0
      %386 = vmatprep.subr.mxu0 0.0
      %387 = vmatpush1.msra.mxu0 0.0
      %388 = vmatprep.subr.mxu0 0.0
      %389 = vmatpush1.msra.mxu0 0.0
      %390 = vmatprep.subr.mxu0 0.0
      %391 = vmatpush1.msra.mxu0 0.0
      %392 = vmatprep.subr.mxu0 0.0
      %393 = vmatpush1.msra.mxu0 0.0
      %394 = vmatprep.subr.mxu0 0.0
      %395 = vmatpush1.msra.mxu0 0.0
      %396 = vmatprep.subr.mxu0 0.0
      %397 = vmatpush1.msra.mxu0 0.0
      %398 = vmatprep.subr.mxu0 0.0
      %399 = vmatpush1.msra.mxu0 0.0
      %400 = vmatprep.subr.mxu0 0.0
      %401 = vmatpush1.msra.mxu0 0.0
      %402 = vmatprep.subr.mxu0 0.0
      %403 = vmatpush1.msra.mxu0 0.0
      %404 = vmatprep.subr.mxu0 0.0
      %405 = vmatpush1.msra.mxu0 0.0
      %406 = vmatprep.subr.mxu0 0.0
      %407 = vmatpush1.msra.mxu0 0.0
      %408 = vmatprep.subr.mxu0 0.0
      %409 = vmatpush1.msra.mxu0 0.0
      %410 = vmatprep.subr.mxu0 0.0
      %411 = vmatpush1.msra.mxu0 0.0
      %412 = vmatprep.subr.mxu0 0.0
      %413 = vmatpush1.msra.mxu0 0.0
      %414 = vmatprep.subr.mxu0 0.0
      %415 = vmatpush1.msra.mxu0 0.0
      %416 = vmatprep.subr.mxu0 0.0
      %417 = vmatpush1.msra.mxu0 0.0
      %418 = vmatprep.subr.mxu0 0.0
      %419 = vmatpush1.msra.mxu0 0.0
      %420 = vmatprep.subr.mxu0 0.0
      %421 = vmatpush1.msra.mxu0 0.0
      %422 = vmatprep.subr.mxu0 0.0
      %423 = vmatpush1.msra.mxu0 0.0
      %424 = vmatprep.mubr.f32.mxu0 0.0
      %425 = vmatmul.mubr.f32.gmra.mrb[0].mxu0 %v355
      %v426 = vpop.f32.mrb[0].mxu0
      %v427 = vadd.f32 0.0, %v426
      %v428 = vpop.f32.mrb[0].mxu0
      %429 = vmatprep.mubr.f32.mxu0 0.0
      %430 = vmatmul.mubr.f32.gmra.mrb[0].mxu0 %v358
      %v431 = vpop.f32.mrb[0].mxu0
      %v432 = vadd.f32 0.0, %v431
      %v433 = vpop.f32.mrb[0].mxu0
      %434 = vdwg.mxu0
      %v435 = vpack.c.bf16 %v432, %v427
      %v436 = vld [vmem:[%s314] sm:$0xff]
      %v437 = vld [vmem:[%s314 + $0x8] sm:$0xff]
      %v438 = vld [vmem:[%s314 + $0x10] sm:$0xff]
      %v439 = vld [vmem:[%s314 + $0x18] sm:$0xff]
      %v440 = vld [vmem:[%s322] sm:$0x3]
      %v442 = vlaneseq
      %v443 = vshrl.u32 %v442, 7
      %v444 = vsub.s32 0, %v443
      %v445 = vrot.slane %v440, %v444
      %v446 = vlaneseq
      %v447 = vshrl.u32 %v446, 7
      %v448 = vsub.s32 1, %v447
      %v449 = vrot.slane %v440, %v448
      %v456 = vunpack.c.l.b16 %v436
      %v457 = vunpack.c.h.b16 %v436
      %v458 = vunpack.c.l.b16 %v437
      %v459 = vunpack.c.h.b16 %v437
      %v460 = vunpack.c.l.b16 %v438
      %v461 = vunpack.c.h.b16 %v438
      %v462 = vunpack.c.l.b16 %v439
      %v463 = vunpack.c.h.b16 %v439
      %v464 = vpack.c.b16 %v458, %v456
      %v465 = vpack.c.b16 %v459, %v457
      %v466 = vpack.c.b16 %v462, %v460
      %v467 = vpack.c.b16 %v463, %v461
      %vm472 = vcmask 261120
      %v474 = vsel %vm472, %v435, 0
      %476 = vmatprep.subr.bf16.mxu0 %v465
      %477 = vmatpush1.bf16.msra.mxu0 %v464
      %478 = vmatprep.subr.bf16.mxu0 %v467
      %479 = vmatpush1.bf16.msra.mxu0 %v466
      %480 = vmatprep.subr.bf16.mxu0 0
      %481 = vmatpush1.bf16.msra.mxu0 0
      %482 = vmatprep.subr.bf16.mxu0 0
      %483 = vmatpush1.bf16.msra.mxu0 0
      %484 = vmatprep.subr.bf16.mxu0 0
      %485 = vmatpush1.bf16.msra.mxu0 0
      %486 = vmatprep.subr.bf16.mxu0 0
      %487 = vmatpush1.bf16.msra.mxu0 0
      %488 = vmatprep.subr.bf16.mxu0 0
      %489 = vmatpush1.bf16.msra.mxu0 0
      %490 = vmatprep.subr.bf16.mxu0 0
      %491 = vmatpush1.bf16.msra.mxu0 0
      %492 = vmatprep.subr.bf16.mxu0 0
      %493 = vmatpush1.bf16.msra.mxu0 0
      %494 = vmatprep.subr.bf16.mxu0 0
      %495 = vmatpush1.bf16.msra.mxu0 0
      %496 = vmatprep.subr.bf16.mxu0 0
      %497 = vmatpush1.bf16.msra.mxu0 0
      %498 = vmatprep.subr.bf16.mxu0 0
      %499 = vmatpush1.bf16.msra.mxu0 0
      %500 = vmatprep.subr.bf16.mxu0 0
      %501 = vmatpush1.bf16.msra.mxu0 0
      %502 = vmatprep.subr.bf16.mxu0 0
      %503 = vmatpush1.bf16.msra.mxu0 0
      %504 = vmatprep.subr.bf16.mxu0 0
      %505 = vmatpush1.bf16.msra.mxu0 0
      %506 = vmatprep.subr.bf16.mxu0 0
      %507 = vmatpush1.bf16.msra.mxu0 0
      %508 = vmatprep.mubr.bf16.mxu0 0
      %509 = vmatmul.mubr.bf16.gmra.mrb[0].mxu0 %v474
      %v510 = vpop.f32.mrb[0].mxu0
      %v511 = vadd.f32 %v445, %v510
      %v512 = vpop.f32.mrb[0].mxu0
      %v513 = vadd.f32 %v449, %v512
      %v514 = vpop.f32.mrb[0].mxu0
      %v515 = vadd.f32 %v445, %v514
      %v516 = vpop.f32.mrb[0].mxu0
      %v517 = vadd.f32 %v449, %v516
      %518 = vdwg.mxu0
      %v519 = vxor.u32 %v513, 2147483648
      %v520 = vxor.u32 %v517, 2147483648
      %v521 = vmul.f32 %v519, 1.442695
      %v522 = vpow.pop %v521
      %v523 = vmul.f32 %v520, 1.442695
      %v524 = vpow.pop %v523
      %v525 = vadd.f32 %v522, 1.0
      %v526 = vadd.f32 %v524, 1.0
      %v527 = vrcp.pop %v525
      %v528 = vmul.f32 1.0, %v527
      %v529 = vrcp.pop %v526
      %v530 = vmul.f32 1.0, %v529
      %v531 = vmul.f32 %v528, %v427
      %v532 = vmul.f32 %v530, %v432
      %v533 = vsub.f32 1.0, %v528
      %v534 = vsub.f32 1.0, %v530
      %v535 = vmax.f32 %v511, 0.0
      %v536 = vmax.f32 %v515, 0.0
      %v537 = vmul.f32 %v533, %v535
      %v538 = vmul.f32 %v534, %v536
      %v539 = vadd.f32 %v531, %v537
      %v540 = vadd.f32 %v532, %v538
      %v541 = vpack.c.bf16 %v540, %v539
      %s542 = scalar_lea.vmem %s314, 32
      %v543 = vld [vmem:[%s542] sm:$0xff]
      %v544 = vld [vmem:[%s542 + $0x8] sm:$0xff]
      %v545 = vld [vmem:[%s542 + $0x10] sm:$0xff]
      %v546 = vld [vmem:[%s542 + $0x18] sm:$0xff]
      %s547 = scalar_lea.vmem %s322, 2
      %v548 = vld [vmem:[%s547] sm:$0x3]
      %v550 = vlaneseq
      %v551 = vshrl.u32 %v550, 7
      %v552 = vsub.s32 0, %v551
      %v553 = vrot.slane %v548, %v552
      %v554 = vlaneseq
      %v555 = vshrl.u32 %v554, 7
      %v556 = vsub.s32 1, %v555
      %v557 = vrot.slane %v548, %v556
      %v564 = vunpack.c.l.b16 %v543
      %v565 = vunpack.c.h.b16 %v543
      %v566 = vunpack.c.l.b16 %v544
      %v567 = vunpack.c.h.b16 %v544
      %v568 = vunpack.c.l.b16 %v545
      %v569 = vunpack.c.h.b16 %v545
      %v570 = vunpack.c.l.b16 %v546
      %v571 = vunpack.c.h.b16 %v546
      %v572 = vpack.c.b16 %v566, %v564
      %v573 = vpack.c.b16 %v567, %v565
      %v574 = vpack.c.b16 %v570, %v568
      %v575 = vpack.c.b16 %v571, %v569
      %v581 = vsel %vm472, %v541, 0
      %583 = vmatprep.subr.bf16.mxu0 %v573
      %584 = vmatpush1.bf16.msra.mxu0 %v572
      %585 = vmatprep.subr.bf16.mxu0 %v575
      %586 = vmatpush1.bf16.msra.mxu0 %v574
      %587 = vmatprep.subr.bf16.mxu0 0
      %588 = vmatpush1.bf16.msra.mxu0 0
      %589 = vmatprep.subr.bf16.mxu0 0
      %590 = vmatpush1.bf16.msra.mxu0 0
      %591 = vmatprep.subr.bf16.mxu0 0
      %592 = vmatpush1.bf16.msra.mxu0 0
      %593 = vmatprep.subr.bf16.mxu0 0
      %594 = vmatpush1.bf16.msra.mxu0 0
      %595 = vmatprep.subr.bf16.mxu0 0
      %596 = vmatpush1.bf16.msra.mxu0 0
      %597 = vmatprep.subr.bf16.mxu0 0
      %598 = vmatpush1.bf16.msra.mxu0 0
      %599 = vmatprep.subr.bf16.mxu0 0
      %600 = vmatpush1.bf16.msra.mxu0 0
      %601 = vmatprep.subr.bf16.mxu0 0
      %602 = vmatpush1.bf16.msra.mxu0 0
      %603 = vmatprep.subr.bf16.mxu0 0
      %604 = vmatpush1.bf16.msra.mxu0 0
      %605 = vmatprep.subr.bf16.mxu0 0
      %606 = vmatpush1.bf16.msra.mxu0 0
      %607 = vmatprep.subr.bf16.mxu0 0
      %608 = vmatpush1.bf16.msra.mxu0 0
      %609 = vmatprep.subr.bf16.mxu0 0
      %610 = vmatpush1.bf16.msra.mxu0 0
      %611 = vmatprep.subr.bf16.mxu0 0
      %612 = vmatpush1.bf16.msra.mxu0 0
      %613 = vmatprep.subr.bf16.mxu0 0
      %614 = vmatpush1.bf16.msra.mxu0 0
      %615 = vmatprep.mubr.bf16.mxu0 0
      %616 = vmatmul.mubr.bf16.gmra.mrb[0].mxu0 %v581
      %v617 = vpop.f32.mrb[0].mxu0
      %v618 = vadd.f32 %v553, %v617
      %v619 = vpop.f32.mrb[0].mxu0
      %v620 = vadd.f32 %v557, %v619
      %v621 = vpop.f32.mrb[0].mxu0
      %v622 = vadd.f32 %v553, %v621
      %v623 = vpop.f32.mrb[0].mxu0
      %v624 = vadd.f32 %v557, %v623
      %625 = vdwg.mxu0
      %v626 = vxor.u32 %v620, 2147483648
      %v627 = vxor.u32 %v624, 2147483648
      %v628 = vmul.f32 %v626, 1.442695
      %v629 = vpow.pop %v628
      %v630 = vmul.f32 %v627, 1.442695
      %v631 = vpow.pop %v630
      %v632 = vadd.f32 %v629, 1.0
      %v633 = vadd.f32 %v631, 1.0
      %v634 = vrcp.pop %v632
      %v635 = vmul.f32 1.0, %v634
      %v636 = vrcp.pop %v633
      %v637 = vmul.f32 1.0, %v636
      %v638 = vmul.f32 %v635, %v539
      %v639 = vmul.f32 %v637, %v540
      %v640 = vsub.f32 1.0, %v635
      %v641 = vsub.f32 1.0, %v637
      %v642 = vmax.f32 %v618, 0.0
      %v643 = vmax.f32 %v622, 0.0
      %v644 = vmul.f32 %v640, %v642
      %v645 = vmul.f32 %v641, %v643
      %v646 = vadd.f32 %v638, %v644
      %v647 = vadd.f32 %v639, %v645
      %s648 = scalar_select %p340, 0.0, 1.0
      %v649 = vstv %s648
      %v650 = vmul.f32 %v649, %v349
      %v651 = vmul.f32 %v649, %v350
      %v652 = vadd.f32 %v646, %v650
      %v653 = vadd.f32 %v647, %v651
      %654 = vst.msk [vmem:[#allocation2] sm:$0xff] %vm472, %v652
      %655 = vst.msk [vmem:[#allocation2 + $0x8] sm:$0xff] %vm472, %v653
      %656 = vst.msk [vmem:[%s335] sm:$0xff] %vm472, %v652
      %657 = vst.msk [vmem:[%s335 + $0x8] sm:$0xff] %vm472, %v653
      %s658 = smul.u32 %s22, 2
      %s659 = sadd.s32 %s658, %s20
      %s660 = smul.u32 2, %s21
      %p661 = scmp.lt.s32.totalorder %s659, 3
      %s662 = scalar_select %p661, %s659, 3
      %p663 = scmp.lt.s32.totalorder %s660, 1
      %s664 = scalar_select %p663, %s660, 1
      %s665 = smul.addr %s662, 2
      %s666 = sadd.s32 %s664, %s665
      %s667 = smul.addr %s666, 8
      %s668 = scalar_lea.vmem %s4, %s667
      // Predicated region
      $region41: #{lbl_highway_bilm_v2_forward.1} parent=35 // pred_check
        %p669 = pneg %p174
      $region42: #{lbl_highway_bilm_v2_forward.1} parent=35 // pred_check_branch
        %671 = sbr.rel (%p669) target = $region44
      $region43: #{lbl_highway_bilm_v2_forward.1} parent=35 // pred_region
        %s672 = smul.u32 %s22, 2
        %s673 = sadd.s32 %s672, %s20
        %s674 = smul.u32 2, %s21
      $region44: #{lbl_highway_bilm_v2_forward.1} parent=35 // pred_fallthru
        _
    $region36: #{lbl_highway_bilm_v2_forward.1} parent=5 // pred_fallthru
      _
    %p675 = scmp.le.s32.totalorder 2, %s10
    // Predicated region
    $region45: #{lbl_highway_bilm_v2_forward.1} parent=5 // pred_check
      %p676 = pneg %p675
    $region46: #{lbl_highway_bilm_v2_forward.1} parent=5 // pred_check_branch
      %678 = sbr.rel (%p676) target = $region48
    $region47: #{lbl_highway_bilm_v2_forward.1} parent=5 // pred_region
      %s679 = ssub.s32 %s10, 2
      // Predicated region
      $region49: #{lbl_highway_bilm_v2_forward.1} parent=47 // pred_check
        %p680 = pneg %p180
      $region50: #{lbl_highway_bilm_v2_forward.1} parent=47 // pred_check_branch
        %682 = sbr.rel (%p680) target = $region52
      $region51: #{lbl_highway_bilm_v2_forward.1} parent=47 // pred_region
        %s683 = smul.u32 %s25, 2
        %s684 = sadd.s32 %s683, %s23
        %s685 = smul.u32 2, %s24
        %p686 = scmp.lt.s32.totalorder %s684, 3
        %s687 = scalar_select %p686, %s684, 3
        %p688 = scmp.lt.s32.totalorder %s685, 1
        %s689 = scalar_select %p688, %s685, 1
        %s690 = smul.addr %s687, 2
        %s691 = sadd.s32 %s689, %s690
        %s692 = smul.addr %s691, 8
        %s693 = scalar_lea.vmem %s4, %s692
      $region52: #{lbl_highway_bilm_v2_forward.1} parent=47 // pred_fallthru
        _
    $region48: #{lbl_highway_bilm_v2_forward.1} parent=5 // pred_fallthru
      _
  $region6: #{lbl_highway_bilm_v2_forward.1} parent=0 // loop_footer
    %s14 = sadd.s32 1, %s10
  $region7: #{lbl_highway_bilm_v2_forward.1} parent=0 // loop_footer_branch
    %9 = sbr.rel target = $region3
  $region8: #{lbl_highway_bilm_v2_forward.1} parent=0 // loop_exit
    _

</llo_original>
